<compile_context>
chip_gen: v5e
topology: v5e:2x2
jax: 0.10.0
libtpu: 0.0.40
codegen_flags: <defaults>
</compile_context>

<pallas_src>
import functools

import jax
import jax.numpy as jnp
from jax.experimental import pallas as pl
from jax.experimental.pallas import tpu as pltpu

_LANE = 128
_SUBLANE = 8


def _round_up(v, m):
    return (v + m - 1) // m * m


def _pad2(a, rows, cols):
    r, c = a.shape
    return jnp.pad(a, ((0, rows - r), (0, cols - c)))


def _make_mlp_kernel(hid_p, hid2_p, out_p):
    """Kernel closure over the (static) padded feature sizes."""
    o1 = hid_p
    o2 = o1 + hid2_p
    o3 = o2 + hid_p
    o4 = o3 + out_p

    def kernel(x_ref, w1_ref, w15_ref, w16_ref, w2_ref, b_ref, o_ref):
        # Static, 128-lane-aligned bias slices out of the single resident
        # bias buffer (f32; bias add + ReLU stay on the VPU in f32).
        b1 = b_ref[:, 0:o1]
        b15 = b_ref[:, o1:o2]
        b16 = b_ref[:, o2:o3]
        b2 = b_ref[:, o3:o4]

        # linear1 + relu (x cast to the MXU compute dtype in-kernel)
        x = x_ref[...].astype(w1_ref.dtype)
        h = jnp.dot(x, w1_ref[...], preferred_element_type=jnp.float32)
        h = jnp.maximum(h + b1, 0.0)
        # linear1_5 + relu
        h = jnp.dot(h.astype(w15_ref.dtype), w15_ref[...],
                    preferred_element_type=jnp.float32)
        h = jnp.maximum(h + b15, 0.0)
        # linear1_6 + relu
        h = jnp.dot(h.astype(w16_ref.dtype), w16_ref[...],
                    preferred_element_type=jnp.float32)
        h = jnp.maximum(h + b16, 0.0)
        # linear2 (no activation)
        out = jnp.dot(h.astype(w2_ref.dtype), w2_ref[...],
                      preferred_element_type=jnp.float32)
        o_ref[...] = (out + b2).astype(o_ref.dtype)

    return kernel


def prepare_params(params, compute_dtype=jnp.bfloat16):
    """One-time weight prep: lane-pad output dims, cast to MXU dtype,
    concatenate biases into a single lane-aligned f32 buffer.

    params: dict with w* of shape [in, out] and b* of shape [1, out]
    (i.e. y = x @ W + b, equivalent to PyTorch's x @ W.T + b)."""
    w1, b1 = params["w1"], params["b1"]
    w15, b15 = params["w15"], params["b15"]
    w16, b16 = params["w16"], params["b16"]
    w2, b2 = params["w2"], params["b2"]

    in_size, hid = w1.shape
    hid2 = w15.shape[1]
    out_size = w2.shape[1]

    hid_p = _round_up(hid, _LANE)
    hid2_p = _round_up(hid2, _LANE)
    out_p = _round_up(out_size, _LANE)

    # Input dim of w1 is left at in_size (matches the unpadded x block).
    prepared = {
        "w1": _pad2(w1, in_size, hid_p).astype(compute_dtype),
        "w15": _pad2(w15, hid_p, hid2_p).astype(compute_dtype),
        "w16": _pad2(w16, hid2_p, hid_p).astype(compute_dtype),
        "w2": _pad2(w2, hid_p, out_p).astype(compute_dtype),
        # All biases in one resident (1, sum_of_padded_dims) f32 buffer.
        "b_cat": jnp.concatenate(
            [_pad2(b1, 1, hid_p), _pad2(b15, 1, hid2_p),
             _pad2(b16, 1, hid_p), _pad2(b2, 1, out_p)],
            axis=1).astype(jnp.float32),
        # Static metadata (Python ints).
        "in_size": in_size,
        "out_size": out_size,
        "hid_p": hid_p,
        "hid2_p": hid2_p,
        "out_p": out_p,
    }
    return prepared


def linear_qnet_extra_layers(x, prepared, *, batch_tile=2048,
                             slice_output=True):
    """Forward pass. x: [B, input_size]; prepared: output of prepare_params."""
    B, in_size = x.shape
    assert in_size == prepared["in_size"]
    hid_p = prepared["hid_p"]
    hid2_p = prepared["hid2_p"]
    out_p = prepared["out_p"]
    out_size = prepared["out_size"]

    # --- batch tiling -------------------------------------------------------
    # Pad batch to a multiple of 8 (sublane).  For big batches cap the tile so
    # the grid has >= 2 steps, letting the "parallel" axis shard across v7x's
    # two TensorCores (harmless extra step on v5e/v6e: ~0.35 us).
    B8 = _round_up(max(B, _SUBLANE), _SUBLANE)
    half = _round_up(max(B8 // 2, _SUBLANE), _SUBLANE)
    tb = min(batch_tile, half)
    B_pad = _round_up(B8, tb)
    grid = (B_pad // tb,)

    if B_pad != B:
        x = jnp.pad(x, ((0, B_pad - B), (0, 0)))

    w1_p = prepared["w1"]
    w15_p = prepared["w15"]
    w16_p = prepared["w16"]
    w2_p = prepared["w2"]
    b_cat = prepared["b_cat"]

    def batch_spec(feat):
        return pl.BlockSpec((tb, feat), lambda i: (i, 0))

    def resident_spec(shape):
        return pl.BlockSpec(shape, lambda i: (0, 0))

    flops = 2 * B_pad * (in_size * hid_p + hid_p * hid2_p
                         + hid2_p * hid_p + hid_p * out_p)
    bytes_accessed = (x.size * x.dtype.itemsize
                      + B_pad * out_p * 4
                      + sum(a.size * a.dtype.itemsize
                            for a in (w1_p, w15_p, w16_p, w2_p, b_cat)))

    kernel = _make_mlp_kernel(hid_p, hid2_p, out_p)

    out_padded = pl.pallas_call(
        kernel,
        out_shape=jax.ShapeDtypeStruct((B_pad, out_p), jnp.float32),
        grid=grid,
        in_specs=[
            batch_spec(in_size),                 # x: unpadded feature dim
            resident_spec(w1_p.shape),
            resident_spec(w15_p.shape),
            resident_spec(w16_p.shape),
            resident_spec(w2_p.shape),
            resident_spec(b_cat.shape),
        ],
        out_specs=batch_spec(out_p),             # lane-dense 128-wide stores
        compiler_params=pltpu.CompilerParams(
            dimension_semantics=("parallel",)),
        cost_estimate=pl.CostEstimate(flops=flops, transcendentals=0,
                                      bytes_accessed=bytes_accessed),
    )(x, w1_p, w15_p, w16_p, w2_p, b_cat)

    if not slice_output:
        return out_padded           # [B_pad, out_p] lane-padded layout
    return out_padded[:B, :out_size].astype(x.dtype)


def init_params(key, input_size, hidden_size, output_size):
    """Deterministic init matching the PyTorch module's layer shapes."""
    ks = jax.random.split(key, 8)

    def linear(kw, kb, fan_in, fan_out):
        # PyTorch nn.Linear default: U(-1/sqrt(fan_in), 1/sqrt(fan_in))
        bound = 1.0 / jnp.sqrt(jnp.float32(fan_in))
        w = jax.random.uniform(kw, (fan_in, fan_out), jnp.float32, -bound, bound)
        b = jax.random.uniform(kb, (1, fan_out), jnp.float32, -bound, bound)
        return w, b

    w1, b1 = linear(ks[0], ks[1], input_size, hidden_size)
    w15, b15 = linear(ks[2], ks[3], hidden_size, hidden_size * 2)
    w16, b16 = linear(ks[4], ks[5], hidden_size * 2, hidden_size)
    w2, b2 = linear(ks[6], ks[7], hidden_size, output_size)
    return {"w1": w1, "b1": b1, "w15": w15, "b15": b15,
            "w16": w16, "b16": b16, "w2": w2, "b2": b2}


def reference_forward(x, p):
    h1 = jnp.maximum(x @ p["w1"] + p["b1"], 0.0)
    h2 = jnp.maximum(h1 @ p["w15"] + p["b15"], 0.0)
    h3 = jnp.maximum(h2 @ p["w16"] + p["b16"], 0.0)
    return h3 @ p["w2"] + p["b2"]


if __name__ == "__main__":
    key = jax.random.PRNGKey(0)
    k_x, k_p = jax.random.split(key)

    batch = 8
    input_size = 16
    hidden_size = 32
    output_size = 8

    x = jax.random.normal(k_x, (batch, input_size), jnp.float32)
    params = init_params(k_p, input_size, hidden_size, output_size)
    ref = reference_forward(x, params)

    # --- strict check: f32 compute, small batch (single grid step) ----------
    prep_f32 = prepare_params(params, compute_dtype=jnp.float32)
    out = jax.block_until_ready(linear_qnet_extra_layers(x, prep_f32))
    assert out.shape == (batch, output_size)
    assert jnp.allclose(out, ref, atol=1e-5, rtol=1e-5)

    # --- default bf16 MXU path, large batch (multi-step parallel grid) ------
    prep_bf16 = prepare_params(params)          # compute_dtype=bfloat16
    big_batch = 1024
    xb = jax.random.normal(k_x, (big_batch, input_size), jnp.float32)
    out_b = jax.block_until_ready(linear_qnet_extra_layers(xb, prep_bf16))
    ref_b = reference_forward(xb, params)
    assert out_b.shape == (big_batch, output_size)
    assert jnp.allclose(out_b, ref_b, atol=5e-2, rtol=5e-2)

    # Large batch with f32 prep as well (exercises multi-step grid strictly).
    out_b32 = jax.block_until_ready(linear_qnet_extra_layers(xb, prep_f32))
    assert jnp.allclose(out_b32, ref_b, atol=1e-4, rtol=1e-4)

    # TODO(synk): the PyTorch module's save() (torch.save of state_dict) has no
    # Pallas equivalent and is intentionally omitted.
    print("KERNEL_OK")
</pallas_src>

<mosaic_0001>
module attributes {stable_mosaic.version = 11 : i64} {
  func.func @kernel(%arg0: i32, %arg1: memref<8x16xf32, #tpu.memory_space<vmem>>, %arg2: memref<16x128xf32, #tpu.memory_space<vmem>>, %arg3: memref<128x128xf32, #tpu.memory_space<vmem>>, %arg4: memref<128x128xf32, #tpu.memory_space<vmem>>, %arg5: memref<128x128xf32, #tpu.memory_space<vmem>>, %arg6: memref<1x512xf32, #tpu.memory_space<vmem>>, %arg7: memref<8x128xf32, #tpu.memory_space<vmem>>) attributes {dimension_semantics = [#tpu.dimension_semantics<parallel>], iteration_bounds = array<i64: 1>, scalar_prefetch = 0 : i64, scratch_operands = 0 : i64, tpu.core_type = #tpu.core_type<tc>, window_params = [{transform_indices = @transform_0, window_bounds = array<i64: 8, 16>}, {pipeline_mode = #tpu.pipeline_mode<synchronous>, transform_indices = @transform_1, window_bounds = array<i64: 16, 128>}, {pipeline_mode = #tpu.pipeline_mode<synchronous>, transform_indices = @transform_2, window_bounds = array<i64: 128, 128>}, {pipeline_mode = #tpu.pipeline_mode<synchronous>, transform_indices = @transform_3, window_bounds = array<i64: 128, 128>}, {pipeline_mode = #tpu.pipeline_mode<synchronous>, transform_indices = @transform_4, window_bounds = array<i64: 128, 128>}, {pipeline_mode = #tpu.pipeline_mode<synchronous>, transform_indices = @transform_5, window_bounds = array<i64: 1, 512>}, {transform_indices = @transform_6, window_bounds = array<i64: 8, 128>}]} {
    %c0 = arith.constant 0 : index
    %c0_0 = arith.constant 0 : index
    %0 = vector.load %arg6[%c0, %c0_0] : memref<1x512xf32, #tpu.memory_space<vmem>>, vector<1x128xf32>
    %c0_1 = arith.constant 0 : index
    %c128 = arith.constant 128 : index
    %1 = vector.load %arg6[%c0_1, %c128] : memref<1x512xf32, #tpu.memory_space<vmem>>, vector<1x128xf32>
    %c0_2 = arith.constant 0 : index
    %c256 = arith.constant 256 : index
    %2 = vector.load %arg6[%c0_2, %c256] : memref<1x512xf32, #tpu.memory_space<vmem>>, vector<1x128xf32>
    %c0_3 = arith.constant 0 : index
    %c384 = arith.constant 384 : index
    %3 = vector.load %arg6[%c0_3, %c384] : memref<1x512xf32, #tpu.memory_space<vmem>>, vector<1x128xf32>
    %c0_4 = arith.constant 0 : index
    %c0_5 = arith.constant 0 : index
    %4 = vector.load %arg1[%c0_4, %c0_5] : memref<8x16xf32, #tpu.memory_space<vmem>>, vector<8x16xf32>
    %c0_6 = arith.constant 0 : index
    %c0_7 = arith.constant 0 : index
    %5 = vector.load %arg2[%c0_6, %c0_7] : memref<16x128xf32, #tpu.memory_space<vmem>>, vector<16x128xf32>
    %cst = arith.constant dense<0.000000e+00> : vector<8x128xf32>
    %6 = tpu.matmul %4, %5, %cst {dimension_numbers = #tpu.dot_dimension_numbers<[1], [0], [0], [1], [0, 0, 1, 1], [], []>} : vector<8x16xf32>, vector<16x128xf32>, vector<8x128xf32> -> vector<8x128xf32>
    %7 = vector.broadcast %0 : vector<1x128xf32> to vector<8x128xf32>
    %8 = arith.addf %6, %7 : vector<8x128xf32>
    %cst_8 = arith.constant 0.000000e+00 : f32
    %9 = vector.broadcast %cst_8 : f32 to vector<8x128xf32>
    %10 = arith.maximumf %8, %9 : vector<8x128xf32>
    %c0_9 = arith.constant 0 : index
    %c0_10 = arith.constant 0 : index
    %11 = vector.load %arg3[%c0_9, %c0_10] : memref<128x128xf32, #tpu.memory_space<vmem>>, vector<128x128xf32>
    %cst_11 = arith.constant dense<0.000000e+00> : vector<8x128xf32>
    %12 = tpu.matmul %10, %11, %cst_11 {dimension_numbers = #tpu.dot_dimension_numbers<[1], [0], [0], [1], [0, 0, 1, 1], [], []>} : vector<8x128xf32>, vector<128x128xf32>, vector<8x128xf32> -> vector<8x128xf32>
    %13 = vector.broadcast %1 : vector<1x128xf32> to vector<8x128xf32>
    %14 = arith.addf %12, %13 : vector<8x128xf32>
    %cst_12 = arith.constant 0.000000e+00 : f32
    %15 = vector.broadcast %cst_12 : f32 to vector<8x128xf32>
    %16 = arith.maximumf %14, %15 : vector<8x128xf32>
    %c0_13 = arith.constant 0 : index
    %c0_14 = arith.constant 0 : index
    %17 = vector.load %arg4[%c0_13, %c0_14] : memref<128x128xf32, #tpu.memory_space<vmem>>, vector<128x128xf32>
    %cst_15 = arith.constant dense<0.000000e+00> : vector<8x128xf32>
    %18 = tpu.matmul %16, %17, %cst_15 {dimension_numbers = #tpu.dot_dimension_numbers<[1], [0], [0], [1], [0, 0, 1, 1], [], []>} : vector<8x128xf32>, vector<128x128xf32>, vector<8x128xf32> -> vector<8x128xf32>
    %19 = vector.broadcast %2 : vector<1x128xf32> to vector<8x128xf32>
    %20 = arith.addf %18, %19 : vector<8x128xf32>
    %cst_16 = arith.constant 0.000000e+00 : f32
    %21 = vector.broadcast %cst_16 : f32 to vector<8x128xf32>
    %22 = arith.maximumf %20, %21 : vector<8x128xf32>
    %c0_17 = arith.constant 0 : index
    %c0_18 = arith.constant 0 : index
    %23 = vector.load %arg5[%c0_17, %c0_18] : memref<128x128xf32, #tpu.memory_space<vmem>>, vector<128x128xf32>
    %cst_19 = arith.constant dense<0.000000e+00> : vector<8x128xf32>
    %24 = tpu.matmul %22, %23, %cst_19 {dimension_numbers = #tpu.dot_dimension_numbers<[1], [0], [0], [1], [0, 0, 1, 1], [], []>} : vector<8x128xf32>, vector<128x128xf32>, vector<8x128xf32> -> vector<8x128xf32>
    %25 = vector.broadcast %3 : vector<1x128xf32> to vector<8x128xf32>
    %26 = arith.addf %24, %25 : vector<8x128xf32>
    %c0_20 = arith.constant 0 : index
    %c0_21 = arith.constant 0 : index
    %27 = vector.load %arg7[%c0_20, %c0_21] : memref<8x128xf32, #tpu.memory_space<vmem>>, vector<8x128xf32>
    tpu.vector_store %arg7[%c0_20, %c0_21], %26 {strides = array<i32>} : memref<8x128xf32, #tpu.memory_space<vmem>>, vector<8x128xf32>,
    return
  }
  func.func @transform_0(%arg0: i32) -> (i32, i32) {
    %c0_i32 = arith.constant 0 : i32
    %c0_i32_0 = arith.constant 0 : i32
    return %arg0, %c0_i32 : i32, i32
  }
  func.func @transform_1(%arg0: i32) -> (i32, i32) {
    %c0_i32 = arith.constant 0 : i32
    %c0_i32_0 = arith.constant 0 : i32
    %c0_i32_1 = arith.constant 0 : i32
    return %c0_i32, %c0_i32_0 : i32, i32
  }
  func.func @transform_2(%arg0: i32) -> (i32, i32) {
    %c0_i32 = arith.constant 0 : i32
    %c0_i32_0 = arith.constant 0 : i32
    %c0_i32_1 = arith.constant 0 : i32
    return %c0_i32, %c0_i32_0 : i32, i32
  }
  func.func @transform_3(%arg0: i32) -> (i32, i32) {
    %c0_i32 = arith.constant 0 : i32
    %c0_i32_0 = arith.constant 0 : i32
    %c0_i32_1 = arith.constant 0 : i32
    return %c0_i32, %c0_i32_0 : i32, i32
  }
  func.func @transform_4(%arg0: i32) -> (i32, i32) {
    %c0_i32 = arith.constant 0 : i32
    %c0_i32_0 = arith.constant 0 : i32
    %c0_i32_1 = arith.constant 0 : i32
    return %c0_i32, %c0_i32_0 : i32, i32
  }
  func.func @transform_5(%arg0: i32) -> (i32, i32) {
    %c0_i32 = arith.constant 0 : i32
    %c0_i32_0 = arith.constant 0 : i32
    %c0_i32_1 = arith.constant 0 : i32
    return %c0_i32, %c0_i32_0 : i32, i32
  }
  func.func @transform_6(%arg0: i32) -> (i32, i32) {
    %c0_i32 = arith.constant 0 : i32
    %c0_i32_0 = arith.constant 0 : i32
    return %arg0, %c0_i32 : i32, i32
  }
}

</mosaic_0001>

<llo_original>
// kernel: tpu_custom_call.1
$region0: #{tpu_custom_call.1}
  #allocation0 [shape = 'u32[]', space=smem, size = 0x4, offset = 0x4, fixed_abs, tag = 'smem constant byte address 0x4 - core index']
  #allocation1 [shape = 'u32[72,128]{1,0:T(1,128)}', space=vmem, size = 0x9000, scoped, tag = 'internal scratch']
  %s0 = inlined_call_operand.hbm [shape: f32[8,16], index: 0, kind: input, shape index: {}]
  %s1 = inlined_call_operand.hbm [shape: f32[16,128], index: 1, kind: input, shape index: {}]
  %s2 = inlined_call_operand.hbm [shape: f32[128,128], index: 2, kind: input, shape index: {}]
  %s3 = inlined_call_operand.hbm [shape: f32[128,128], index: 3, kind: input, shape index: {}]
  %s4 = inlined_call_operand.hbm [shape: f32[128,128], index: 4, kind: input, shape index: {}]
  %s5 = inlined_call_operand.vmem [shape: f32[1,512], index: 5, kind: input, shape index: {}]
  %s6 = inlined_call_operand.hbm [shape: f32[8,128], index: 6, kind: output, shape index: {}]
  %s7 = sld [smem:[#allocation0]]
  $region54: #{tpu_custom_call.1} parent=0
    _
  %s9 = ssub.s32 1, %s7
  %s10 = scalar_select 0, %s9, %s7
  $region1: #{tpu_custom_call.1} parent=0
    #allocation2 [shape = 'u8[4096]{0}', space=vmem, size = 0x1000, scoped, tag = 'input window, operand 0, single buffered']
    #allocation3 [shape = 's32[1]{0}', space=sflag, size = 0x4, scoped, tag = 'scoped memory for tpu_custom_call.1']
    #allocation4 [shape = 's32[1]{0}', space=sflag, size = 0x4, scoped, tag = 'scoped memory for tpu_custom_call.1']
    #allocation5 [shape = 'u8[8192]{0}', space=vmem, size = 0x2000, scoped, tag = 'input window, operand 1, single buffered']
    #allocation6 [shape = 's32[1]{0}', space=sflag, size = 0x4, scoped, tag = 'scoped memory for tpu_custom_call.1']
    #allocation7 [shape = 'u8[65536]{0}', space=vmem, size = 0x10000, scoped, tag = 'input window, operand 2, single buffered']
    #allocation8 [shape = 'u8[65536]{0}', space=vmem, size = 0x10000, scoped, tag = 'input window, operand 3, single buffered']
    #allocation9 [shape = 's32[1]{0}', space=sflag, size = 0x4, scoped, tag = 'scoped memory for tpu_custom_call.1']
    #allocation10 [shape = 'u8[65536]{0}', space=vmem, size = 0x10000, scoped, tag = 'input window, operand 4, single buffered']
    #allocation11 [shape = 'u8[4096]{0}', space=vmem, size = 0x1000, scoped, tag = 'output window, operand 0, single buffered']
    %11 = vsyncpa [#allocation3], 0
    %12 = vsyncpa [#allocation6], 0
    %13 = vsyncpa [#allocation9], 0
    %14 = vsyncpa [#allocation4], 0
    // Predicated region
    $region2: #{tpu_custom_call.1} parent=1 // pred_check
      _
    $region3: #{tpu_custom_call.1} parent=1 // pred_check_branch
      %16 = sbr.rel (0) target = $region5
    $region4: #{tpu_custom_call.1} parent=1 // pred_region
      %18 = vsyncadd [#allocation3], 0
      %s20 = sshll.u32 %s0, 4
      %s21 = int_to_ptr.hbm [resolvable:$true] %s20
      %s22 = sshll.u32 [#allocation2], 4
      %s23 = int_to_ptr.vmem [resolvable:$true] %s22
      %25 = dma.hbm_to_vmem [thread:$0]  %s21, 128, %s23, [#allocation3]
    $region5: #{tpu_custom_call.1} parent=1 // pred_fallthru
      _
    // Predicated region
    $region6: #{tpu_custom_call.1} parent=1 // pred_check
      _
    $region7: #{tpu_custom_call.1} parent=1 // pred_check_branch
      %27 = sbr.rel (0) target = $region9
    $region8: #{tpu_custom_call.1} parent=1 // pred_region
      %29 = vsyncadd [#allocation6], 0
      %s30 = sshll.u32 %s1, 4
      %s31 = int_to_ptr.hbm [resolvable:$true] %s30
      %s32 = sshll.u32 [#allocation5], 4
      %s33 = int_to_ptr.vmem [resolvable:$true] %s32
      %38 = dma.hbm_to_vmem [thread:$0]  %s31, 256, %s33, [#allocation6], 128, 128, 8
    $region9: #{tpu_custom_call.1} parent=1 // pred_fallthru
      _
    // Predicated region
    $region10: #{tpu_custom_call.1} parent=1 // pred_check
      _
    $region11: #{tpu_custom_call.1} parent=1 // pred_check_branch
      %40 = sbr.rel (0) target = $region13
    $region12: #{tpu_custom_call.1} parent=1 // pred_region
      %42 = vsyncadd [#allocation6], 0
      %s43 = sshll.u32 %s2, 4
      %s44 = int_to_ptr.hbm [resolvable:$true] %s43
      %s45 = sshll.u32 [#allocation7], 4
      %s46 = int_to_ptr.vmem [resolvable:$true] %s45
      %51 = dma.hbm_to_vmem [thread:$0]  %s44, 2048, %s46, [#allocation6], 128, 128, 8
    $region13: #{tpu_custom_call.1} parent=1 // pred_fallthru
      _
    // Predicated region
    $region14: #{tpu_custom_call.1} parent=1 // pred_check
      _
    $region15: #{tpu_custom_call.1} parent=1 // pred_check_branch
      %53 = sbr.rel (0) target = $region17
    $region16: #{tpu_custom_call.1} parent=1 // pred_region
      %55 = vsyncadd [#allocation9], 0
      %s56 = sshll.u32 %s3, 4
      %s57 = int_to_ptr.hbm [resolvable:$true] %s56
      %s58 = sshll.u32 [#allocation8], 4
      %s59 = int_to_ptr.vmem [resolvable:$true] %s58
      %64 = dma.hbm_to_vmem [thread:$0]  %s57, 2048, %s59, [#allocation9], 128, 128, 8
    $region17: #{tpu_custom_call.1} parent=1 // pred_fallthru
      _
    // Predicated region
    $region18: #{tpu_custom_call.1} parent=1 // pred_check
      _
    $region19: #{tpu_custom_call.1} parent=1 // pred_check_branch
      %66 = sbr.rel (0) target = $region21
    $region20: #{tpu_custom_call.1} parent=1 // pred_region
      %68 = vsyncadd [#allocation9], 0
      %s69 = sshll.u32 %s4, 4
      %s70 = int_to_ptr.hbm [resolvable:$true] %s69
      %s71 = sshll.u32 [#allocation10], 4
      %s72 = int_to_ptr.vmem [resolvable:$true] %s71
      %77 = dma.hbm_to_vmem [thread:$0]  %s70, 2048, %s72, [#allocation9], 128, 128, 8
    $region21: #{tpu_custom_call.1} parent=1 // pred_fallthru
      _
    // Predicated region
    $region22: #{tpu_custom_call.1} parent=1 // pred_check
      _
    $region23: #{tpu_custom_call.1} parent=1 // pred_check_branch
      %79 = sbr.rel (0) target = $region25
    $region24: #{tpu_custom_call.1} parent=1 // pred_region
      _
    $region25: #{tpu_custom_call.1} parent=1 // pred_fallthru
      _
    // Predicated region
    $region26: #{tpu_custom_call.1} parent=1 // pred_check
      _
    $region27: #{tpu_custom_call.1} parent=1 // pred_check_branch
      %81 = sbr.rel (0) target = $region29
    $region28: #{tpu_custom_call.1} parent=1 // pred_region
      %83 = dma.done [#allocation3], 128
    $region29: #{tpu_custom_call.1} parent=1 // pred_fallthru
      _
    // Predicated region
    $region30: #{tpu_custom_call.1} parent=1 // pred_check
      _
    $region31: #{tpu_custom_call.1} parent=1 // pred_check_branch
      %85 = sbr.rel (0) target = $region33
    $region32: #{tpu_custom_call.1} parent=1 // pred_region
      %87 = dma.done [#allocation6], 256
    $region33: #{tpu_custom_call.1} parent=1 // pred_fallthru
      _
    // Predicated region
    $region34: #{tpu_custom_call.1} parent=1 // pred_check
      _
    $region35: #{tpu_custom_call.1} parent=1 // pred_check_branch
      %89 = sbr.rel (0) target = $region37
    $region36: #{tpu_custom_call.1} parent=1 // pred_region
      %91 = dma.done [#allocation6], 2048
    $region37: #{tpu_custom_call.1} parent=1 // pred_fallthru
      _
    // Predicated region
    $region38: #{tpu_custom_call.1} parent=1 // pred_check
      _
    $region39: #{tpu_custom_call.1} parent=1 // pred_check_branch
      %93 = sbr.rel (0) target = $region41
    $region40: #{tpu_custom_call.1} parent=1 // pred_region
      %95 = dma.done [#allocation9], 2048
    $region41: #{tpu_custom_call.1} parent=1 // pred_fallthru
      _
    // Predicated region
    $region42: #{tpu_custom_call.1} parent=1 // pred_check
      _
    $region43: #{tpu_custom_call.1} parent=1 // pred_check_branch
      %97 = sbr.rel (0) target = $region45
    $region44: #{tpu_custom_call.1} parent=1 // pred_region
      %99 = dma.done [#allocation9], 2048
    $region45: #{tpu_custom_call.1} parent=1 // pred_fallthru
      _
    %v100 = vld [vmem:[%s5] sm:$0x1]
    %v101 = vld [vmem:[%s5 + $0x1] sm:$0x1]
    %v102 = vld [vmem:[%s5 + $0x2] sm:$0x1]
    %v103 = vld [vmem:[%s5 + $0x3] sm:$0x1]
    %v104 = vld [vmem:[#allocation2] sm:$0xff]
    %v105 = vld [vmem:[#allocation5] sm:$0xff]
    %v106 = vld [vmem:[#allocation5 + $0x8] sm:$0xff]
    %v108 = vperm.slane %v100, 0
    %vm110 = vcmask 130048
    %v112 = vsel %vm110, %v104, 0
    %114 = vmatpush.msra.mxu0 0.0
    %115 = vmatpush.msra.mxu0 0.0
    %116 = vmatpush.msra.mxu0 0.0
    %117 = vmatpush.msra.mxu0 0.0
    %118 = vmatpush.msra.mxu0 0.0
    %119 = vmatpush.msra.mxu0 0.0
    %120 = vmatpush.msra.mxu0 0.0
    %121 = vmatpush.msra.mxu0 0.0
    %122 = vmatpush.msra.mxu0 0.0
    %123 = vmatpush.msra.mxu0 0.0
    %124 = vmatpush.msra.mxu0 0.0
    %125 = vmatpush.msra.mxu0 0.0
    %126 = vmatpush.msra.mxu0 0.0
    %127 = vmatpush.msra.mxu0 0.0
    %128 = vmatpush.msra.mxu0 %v106
    %129 = vmatpush.msra.mxu0 %v105
    %130 = vmatmul.f32.gmra.mxu0 %v112
    %v131 = vpop.f32.mrf.mxu0
    %v132 = vadd.f32 %v108, %v131
    %133 = vdwg.mxu0
    %v134 = vmax.f32 %v132, 0.0
    %v135 = vld [vmem:[#allocation7] sm:$0xff]
    %v136 = vld [vmem:[#allocation7 + $0x8] sm:$0xff]
    %v137 = vld [vmem:[#allocation7 + $0x10] sm:$0xff]
    %v138 = vld [vmem:[#allocation7 + $0x18] sm:$0xff]
    %v139 = vld [vmem:[#allocation7 + $0x20] sm:$0xff]
    %v140 = vld [vmem:[#allocation7 + $0x28] sm:$0xff]
    %v141 = vld [vmem:[#allocation7 + $0x30] sm:$0xff]
    %v142 = vld [vmem:[#allocation7 + $0x38] sm:$0xff]
    %v143 = vld [vmem:[#allocation7 + $0x40] sm:$0xff]
    %v144 = vld [vmem:[#allocation7 + $0x48] sm:$0xff]
    %v145 = vld [vmem:[#allocation7 + $0x50] sm:$0xff]
    %v146 = vld [vmem:[#allocation7 + $0x58] sm:$0xff]
    %v147 = vld [vmem:[#allocation7 + $0x60] sm:$0xff]
    %v148 = vld [vmem:[#allocation7 + $0x68] sm:$0xff]
    %v149 = vld [vmem:[#allocation7 + $0x70] sm:$0xff]
    %v150 = vld [vmem:[#allocation7 + $0x78] sm:$0xff]
    %v152 = vperm.slane %v101, 0
    %154 = vmatpush.msra.mxu0 %v150
    %155 = vmatpush.msra.mxu0 %v149
    %156 = vmatpush.msra.mxu0 %v148
    %157 = vmatpush.msra.mxu0 %v147
    %158 = vmatpush.msra.mxu0 %v146
    %159 = vmatpush.msra.mxu0 %v145
    %160 = vmatpush.msra.mxu0 %v144
    %161 = vmatpush.msra.mxu0 %v143
    %162 = vmatpush.msra.mxu0 %v142
    %163 = vmatpush.msra.mxu0 %v141
    %164 = vmatpush.msra.mxu0 %v140
    %165 = vmatpush.msra.mxu0 %v139
    %166 = vmatpush.msra.mxu0 %v138
    %167 = vmatpush.msra.mxu0 %v137
    %168 = vmatpush.msra.mxu0 %v136
    %169 = vmatpush.msra.mxu0 %v135
    %170 = vmatmul.f32.gmra.mxu0 %v134
    %v171 = vpop.f32.mrf.mxu0
    %v172 = vadd.f32 %v152, %v171
    %173 = vdwg.mxu0
    %v174 = vmax.f32 %v172, 0.0
    %v175 = vld [vmem:[#allocation8] sm:$0xff]
    %v176 = vld [vmem:[#allocation8 + $0x8] sm:$0xff]
    %v177 = vld [vmem:[#allocation8 + $0x10] sm:$0xff]
    %v178 = vld [vmem:[#allocation8 + $0x18] sm:$0xff]
    %v179 = vld [vmem:[#allocation8 + $0x20] sm:$0xff]
    %v180 = vld [vmem:[#allocation8 + $0x28] sm:$0xff]
    %v181 = vld [vmem:[#allocation8 + $0x30] sm:$0xff]
    %v182 = vld [vmem:[#allocation8 + $0x38] sm:$0xff]
    %v183 = vld [vmem:[#allocation8 + $0x40] sm:$0xff]
    %v184 = vld [vmem:[#allocation8 + $0x48] sm:$0xff]
    %v185 = vld [vmem:[#allocation8 + $0x50] sm:$0xff]
    %v186 = vld [vmem:[#allocation8 + $0x58] sm:$0xff]
    %v187 = vld [vmem:[#allocation8 + $0x60] sm:$0xff]
    %v188 = vld [vmem:[#allocation8 + $0x68] sm:$0xff]
    %v189 = vld [vmem:[#allocation8 + $0x70] sm:$0xff]
    %v190 = vld [vmem:[#allocation8 + $0x78] sm:$0xff]
    %v192 = vperm.slane %v102, 0
    %194 = vmatpush.msra.mxu0 %v190
    %195 = vmatpush.msra.mxu0 %v189
    %196 = vmatpush.msra.mxu0 %v188
    %197 = vmatpush.msra.mxu0 %v187
    %198 = vmatpush.msra.mxu0 %v186
    %199 = vmatpush.msra.mxu0 %v185
    %200 = vmatpush.msra.mxu0 %v184
    %201 = vmatpush.msra.mxu0 %v183
    %202 = vmatpush.msra.mxu0 %v182
    %203 = vmatpush.msra.mxu0 %v181
    %204 = vmatpush.msra.mxu0 %v180
    %205 = vmatpush.msra.mxu0 %v179
    %206 = vmatpush.msra.mxu0 %v178
    %207 = vmatpush.msra.mxu0 %v177
    %208 = vmatpush.msra.mxu0 %v176
    %209 = vmatpush.msra.mxu0 %v175
    %210 = vmatmul.f32.gmra.mxu0 %v174
    %v211 = vpop.f32.mrf.mxu0
    %v212 = vadd.f32 %v192, %v211
    %213 = vdwg.mxu0
    %v214 = vmax.f32 %v212, 0.0
    %v215 = vld [vmem:[#allocation10] sm:$0xff]
    %v216 = vld [vmem:[#allocation10 + $0x8] sm:$0xff]
    %v217 = vld [vmem:[#allocation10 + $0x10] sm:$0xff]
    %v218 = vld [vmem:[#allocation10 + $0x18] sm:$0xff]
    %v219 = vld [vmem:[#allocation10 + $0x20] sm:$0xff]
    %v220 = vld [vmem:[#allocation10 + $0x28] sm:$0xff]
    %v221 = vld [vmem:[#allocation10 + $0x30] sm:$0xff]
    %v222 = vld [vmem:[#allocation10 + $0x38] sm:$0xff]
    %v223 = vld [vmem:[#allocation10 + $0x40] sm:$0xff]
    %v224 = vld [vmem:[#allocation10 + $0x48] sm:$0xff]
    %v225 = vld [vmem:[#allocation10 + $0x50] sm:$0xff]
    %v226 = vld [vmem:[#allocation10 + $0x58] sm:$0xff]
    %v227 = vld [vmem:[#allocation10 + $0x60] sm:$0xff]
    %v228 = vld [vmem:[#allocation10 + $0x68] sm:$0xff]
    %v229 = vld [vmem:[#allocation10 + $0x70] sm:$0xff]
    %v230 = vld [vmem:[#allocation10 + $0x78] sm:$0xff]
    %v232 = vperm.slane %v103, 0
    %234 = vmatpush.msra.mxu0 %v230
    %235 = vmatpush.msra.mxu0 %v229
    %236 = vmatpush.msra.mxu0 %v228
    %237 = vmatpush.msra.mxu0 %v227
    %238 = vmatpush.msra.mxu0 %v226
    %239 = vmatpush.msra.mxu0 %v225
    %240 = vmatpush.msra.mxu0 %v224
    %241 = vmatpush.msra.mxu0 %v223
    %242 = vmatpush.msra.mxu0 %v222
    %243 = vmatpush.msra.mxu0 %v221
    %244 = vmatpush.msra.mxu0 %v220
    %245 = vmatpush.msra.mxu0 %v219
    %246 = vmatpush.msra.mxu0 %v218
    %247 = vmatpush.msra.mxu0 %v217
    %248 = vmatpush.msra.mxu0 %v216
    %249 = vmatpush.msra.mxu0 %v215
    %250 = vmatmul.f32.gmra.mxu0 %v214
    %v251 = vpop.f32.mrf.mxu0
    %v252 = vadd.f32 %v232, %v251
    %253 = vdwg.mxu0
    %254 = vst [vmem:[#allocation11] sm:$0xff] %v252
    // Predicated region
    $region46: #{tpu_custom_call.1} parent=1 // pred_check
      _
    $region47: #{tpu_custom_call.1} parent=1 // pred_check_branch
      %256 = sbr.rel (0) target = $region49
    $region48: #{tpu_custom_call.1} parent=1 // pred_region
      %258 = vsyncadd [#allocation4], 0
      %s260 = sshll.u32 [#allocation11], 4
      %s261 = int_to_ptr.vmem [resolvable:$true] %s260
      %s262 = sshll.u32 %s6, 4
      %s263 = int_to_ptr.hbm [resolvable:$true] %s262
      %265 = dma.vmem_to_hbm [thread:$0]  %s261, 128, %s263, [#allocation4]
    $region49: #{tpu_custom_call.1} parent=1 // pred_fallthru
      _
    // Predicated region
    $region50: #{tpu_custom_call.1} parent=1 // pred_check
      _
    $region51: #{tpu_custom_call.1} parent=1 // pred_check_branch
      %267 = sbr.rel (0) target = $region53
    $region52: #{tpu_custom_call.1} parent=1 // pred_region
      %269 = dma.done [#allocation4], 128
    $region53: #{tpu_custom_call.1} parent=1 // pred_fallthru
      _
    %270 = vsyncpa [#allocation3], 1
    %271 = vsyncpa [#allocation6], 1
    %272 = vsyncpa [#allocation9], 1
    %273 = vsyncpa [#allocation4], 1

</llo_original>
